<compile_context>
chip_gen: v7x
topology: tpu7x:2x2x1
jax: 0.10.0
libtpu: 0.0.40
codegen_flags: <defaults>
</compile_context>

<pallas_src>
import jax
import jax.numpy as jnp
from jax.experimental import pallas as pl
from jax.experimental.pallas import tpu as pltpu


def _floor_div_kernel(x_ref, y_ref, o_ref):
    xf = x_ref[...].astype(jnp.float32)
    yf = y_ref[...].astype(jnp.float32)

    # Exact-enough divide: relative error of the f32 divide is a few ulps
    # (<= ~2^-21), i.e. absolute error <= 128 * 2^-21 ~ 6e-5.  Non-integer
    # int8 quotients are at least 1/127 from any integer, so floor() is
    # already exact for them.  The only possible failure is an exact-integer
    # quotient rounding a hair low (floor undershoots by exactly 1); that
    # case is detected exactly below: q, x, y and their products (<= 2^14 in
    # magnitude) are exact integers in f32, and r == y iff the undershoot
    # happened.
    q = jnp.floor(xf / yf)
    r = xf - q * yf
    q = jnp.where(r == yf, q + 1.0, q)

    # f32 -> int32 -> int8 so -128 // -1 == 128 wraps to -128 (torch int8).
    o_ref[...] = q.astype(jnp.int32).astype(o_ref.dtype)


_LANE_CHOICES = (1024, 512, 256, 128)


def _block_config():
    """(int8 bytes per operand per grid step, vmem_limit_bytes), VMEM-aware."""
    vmem_bytes = 64 * 1024 * 1024  # conservative fallback = v7x per-TC VMEM
    try:
        vmem_bytes = int(pltpu.get_tpu_info().vmem_capacity_bytes)
    except Exception:
        pass
    if vmem_bytes >= 96 * 1024 * 1024:
        # v5e / v6e: 128 MiB physical VMEM -> bigger tiles, fewer grid steps.
        return 2 * 1024 * 1024, 80 * 1024 * 1024
    # v7x-class (64 MiB physical): keep the f32 working set + double buffers
    # comfortably inside scoped VMEM.
    return 1 * 1024 * 1024, 40 * 1024 * 1024


def _floor_div_flat_aligned(xf, yf, out_dtype):
    """Floor-divide flat int8 vectors whose length is a multiple of 128."""
    n = xf.shape[0]
    lanes = 128
    for c in _LANE_CHOICES:
        if n % c == 0:
            lanes = c
            break
    rows = n // lanes

    block_bytes, vmem_limit = _block_config()
    max_rows = max(32, (block_bytes // lanes) // 32 * 32)

    if rows <= max_rows:
        row_tile = rows
        if rows >= 64:
            # Keep at least 2 grid steps so the "parallel" axis can shard
            # across the 2 TensorCores of a v7x chip (harmless on 1-TC parts).
            half = -(-rows // 2)
            row_tile = min(rows, ((half + 31) // 32) * 32)
    else:
        row_tile = max_rows
    grid_r = pl.cdiv(rows, row_tile)

    x2d = xf.reshape(rows, lanes)   # contiguous reshape: no HBM copy
    y2d = yf.reshape(rows, lanes)

    out = pl.pallas_call(
        _floor_div_kernel,
        out_shape=jax.ShapeDtypeStruct((rows, lanes), out_dtype),
        grid=(grid_r,),
        in_specs=[
            pl.BlockSpec((row_tile, lanes), lambda i: (i, 0)),
            pl.BlockSpec((row_tile, lanes), lambda i: (i, 0)),
        ],
        out_specs=pl.BlockSpec((row_tile, lanes), lambda i: (i, 0)),
        compiler_params=pltpu.CompilerParams(
            dimension_semantics=("parallel",),
            vmem_limit_bytes=vmem_limit,
        ),
    )(x2d, y2d)
    return out.reshape(-1)


def floor_div_int8(x, x2):
    """Elementwise torch.div(x, x2, rounding_mode='floor') for int8 tensors."""
    assert x.shape == x2.shape, "broadcasting not needed for this module"
    orig_shape = x.shape
    out_dtype = x.dtype
    n = x.size
    if n == 0:
        return jnp.zeros(orig_shape, out_dtype)

    xf = x.reshape(-1)
    yf = x2.reshape(-1)

    if n % 128 == 0:
        return _floor_div_flat_aligned(xf, yf, out_dtype).reshape(orig_shape)

    # Ragged size: run the kernel on the 128-aligned bulk and compute the
    # (<128 element) tail with plain jnp -- no whole-array pad copies.
    n_main = (n // 128) * 128
    tail_out = jnp.floor_divide(
        xf[n_main:].astype(jnp.int32), yf[n_main:].astype(jnp.int32)
    ).astype(out_dtype)
    if n_main == 0:
        return tail_out.reshape(orig_shape)
    main_out = _floor_div_flat_aligned(xf[:n_main], yf[:n_main], out_dtype)
    return jnp.concatenate([main_out, tail_out]).reshape(orig_shape)


if __name__ == "__main__":
    key = jax.random.PRNGKey(0)
    k1, k2, k3 = jax.random.split(key, 3)

    # Deterministic small inputs consistent with the module's elementwise op.
    shape = (2, 4, 16, 16)
    x = jax.random.randint(k1, shape, -128, 128, dtype=jnp.int32).astype(jnp.int8)
    # divisor: nonzero int8 values (magnitude in [1, 127], random sign)
    mag = jax.random.randint(k2, shape, 1, 128, dtype=jnp.int32)
    sign = jnp.where(jax.random.bernoulli(k3, 0.5, shape), 1, -1)
    x2 = (mag * sign).astype(jnp.int8)

    out = floor_div_int8(x, x2)
    jax.block_until_ready(out)

    ref = jnp.floor_divide(x.astype(jnp.int32), x2.astype(jnp.int32)).astype(jnp.int8)
    assert out.shape == shape and out.dtype == jnp.int8
    assert bool(jnp.all(out == ref)), "mismatch vs reference floor-divide"

    # Exhaustive correctness check over the full int8 x (nonzero int8) domain,
    # including -128 // -1 wrap.
    xs = jnp.arange(-128, 128, dtype=jnp.int32)
    ys = jnp.concatenate(
        [jnp.arange(-128, 0, dtype=jnp.int32), jnp.arange(1, 128, dtype=jnp.int32)]
    )
    xg, yg = jnp.meshgrid(xs, ys, indexing="ij")
    out2 = floor_div_int8(xg.astype(jnp.int8), yg.astype(jnp.int8))
    jax.block_until_ready(out2)
    ref2 = jnp.floor_divide(xg, yg).astype(jnp.int8)
    assert bool(jnp.all(out2 == ref2)), "exhaustive int8 floor-divide mismatch"

    # Ragged size exercises the bulk + tail path (no full-array pad copies).
    n3 = 1000
    k4, k5 = jax.random.split(k3)
    x3 = jax.random.randint(k4, (n3,), -128, 128, dtype=jnp.int32).astype(jnp.int8)
    y3m = jax.random.randint(k5, (n3,), 1, 128, dtype=jnp.int32)
    y3 = jnp.where(jnp.arange(n3) % 2 == 0, y3m, -y3m).astype(jnp.int8)
    out3 = floor_div_int8(x3, y3)
    jax.block_until_ready(out3)
    ref3 = jnp.floor_divide(x3.astype(jnp.int32), y3.astype(jnp.int32)).astype(jnp.int8)
    assert bool(jnp.all(out3 == ref3)), "ragged int8 floor-divide mismatch"

    print("KERNEL_OK")
</pallas_src>

<mosaic_0001>
module attributes {stable_mosaic.version = 11 : i64} {
  func.func @_floor_div_kernel(%arg0: i32, %arg1: memref<2x1024xi8, #tpu.memory_space<vmem>>, %arg2: memref<2x1024xi8, #tpu.memory_space<vmem>>, %arg3: memref<2x1024xi8, #tpu.memory_space<vmem>>) attributes {dimension_semantics = [#tpu.dimension_semantics<parallel>], iteration_bounds = array<i64: 1>, scalar_prefetch = 0 : i64, scratch_operands = 0 : i64, tpu.core_type = #tpu.core_type<tc>, window_params = [{transform_indices = @transform_0, window_bounds = array<i64: 2, 1024>}, {transform_indices = @transform_1, window_bounds = array<i64: 2, 1024>}, {transform_indices = @transform_2, window_bounds = array<i64: 2, 1024>}]} {
    %c0 = arith.constant 0 : index
    %c0_0 = arith.constant 0 : index
    %0 = vector.load %arg1[%c0, %c0_0] : memref<2x1024xi8, #tpu.memory_space<vmem>>, vector<2x1024xi8>
    %1 = arith.sitofp %0 : vector<2x1024xi8> to vector<2x1024xf32>
    %c0_1 = arith.constant 0 : index
    %c0_2 = arith.constant 0 : index
    %2 = vector.load %arg2[%c0_1, %c0_2] : memref<2x1024xi8, #tpu.memory_space<vmem>>, vector<2x1024xi8>
    %3 = arith.sitofp %2 : vector<2x1024xi8> to vector<2x1024xf32>
    %4 = arith.divf %1, %3 : vector<2x1024xf32>
    %5 = math.floor %4 : vector<2x1024xf32>
    %6 = arith.mulf %5, %3 : vector<2x1024xf32>
    %7 = arith.subf %1, %6 : vector<2x1024xf32>
    %8 = arith.cmpf oeq, %7, %3 : vector<2x1024xf32>
    %cst = arith.constant 1.000000e+00 : f32
    %9 = vector.broadcast %cst : f32 to vector<2x1024xf32>
    %10 = arith.addf %5, %9 : vector<2x1024xf32>
    %11 = arith.select %8, %10, %5 : vector<2x1024xi1>, vector<2x1024xf32>
    %12 = arith.fptosi %11 : vector<2x1024xf32> to vector<2x1024xi32>
    %13 = arith.trunci %12 : vector<2x1024xi32> to vector<2x1024xi8>
    %c0_3 = arith.constant 0 : index
    %c0_4 = arith.constant 0 : index
    %14 = vector.load %arg3[%c0_3, %c0_4] : memref<2x1024xi8, #tpu.memory_space<vmem>>, vector<2x1024xi8>
    tpu.vector_store %arg3[%c0_3, %c0_4], %13 {strides = array<i32>} : memref<2x1024xi8, #tpu.memory_space<vmem>>, vector<2x1024xi8>,
    return
  }
  func.func @transform_0(%arg0: i32) -> (i32, i32) {
    %c0_i32 = arith.constant 0 : i32
    %c0_i32_0 = arith.constant 0 : i32
    return %arg0, %c0_i32 : i32, i32
  }
  func.func @transform_1(%arg0: i32) -> (i32, i32) {
    %c0_i32 = arith.constant 0 : i32
    %c0_i32_0 = arith.constant 0 : i32
    return %arg0, %c0_i32 : i32, i32
  }
  func.func @transform_2(%arg0: i32) -> (i32, i32) {
    %c0_i32 = arith.constant 0 : i32
    %c0_i32_0 = arith.constant 0 : i32
    return %arg0, %c0_i32 : i32, i32
  }
}

</mosaic_0001>

<llo_original>
// kernel: tpu_custom_call.1
$region0: #{tpu_custom_call.1}
  #allocation0 [shape = 'u32[]', space=smem, size = 0x4, offset = 0x4, fixed_abs, tag = 'smem constant byte address 0x4 - core index']
  #allocation1 [shape = 'u32[144,128]{1,0:T(1,128)}', space=vmem, size = 0x12000, scoped, tag = 'internal scratch']
  %s0 = inlined_call_operand.hbm [shape: s8[2,1024], index: 0, kind: input, shape index: {}]
  %s1 = inlined_call_operand.hbm [shape: s8[2,1024], index: 1, kind: input, shape index: {}]
  %s2 = inlined_call_operand.hbm [shape: s8[2,1024], index: 2, kind: output, shape index: {}]
  %s3 = sld [smem:[#allocation0]]
  $region26: #{tpu_custom_call.1} parent=0
    _
  %s5 = ssub.s32 1, %s3
  %s6 = scalar_select 0, %s5, %s3
  $region1: #{tpu_custom_call.1} parent=0
    #allocation2 [shape = 'u8[4096]{0}', space=vmem, size = 0x1000, scoped, tag = 'input window, operand 0, single buffered']
    #allocation3 [shape = 's32[1]{0}', space=sflag, size = 0x4, scoped, tag = 'scoped memory for tpu_custom_call.1']
    #allocation4 [shape = 's32[1]{0}', space=sflag, size = 0x4, scoped, tag = 'scoped memory for tpu_custom_call.1']
    #allocation5 [shape = 'u8[4096]{0}', space=vmem, size = 0x1000, scoped, tag = 'input window, operand 1, single buffered']
    #allocation6 [shape = 's32[1]{0}', space=sflag, size = 0x4, scoped, tag = 'scoped memory for tpu_custom_call.1']
    #allocation7 [shape = 'u8[4096]{0}', space=vmem, size = 0x1000, scoped, tag = 'output window, operand 0, single buffered']
    %7 = vsyncpa [#allocation3], 0
    %8 = vsyncpa [#allocation6], 0
    %9 = vsyncpa [#allocation4], 0
    // Predicated region
    $region2: #{tpu_custom_call.1} parent=1 // pred_check
      _
    $region3: #{tpu_custom_call.1} parent=1 // pred_check_branch
      %11 = sbr.rel (0) target = $region5
    $region4: #{tpu_custom_call.1} parent=1 // pred_region
      %s13 = ssub.s32 128, 128
      %14 = vsyncadd [#allocation3], %s13
      %s16 = sshll.u32 [#allocation2], 4
      %s17 = int_to_ptr.vmem [resolvable:$true] %s16
      %19 = dma.hbm_to_vmem [thread:$0]  %s0, 128, %s17, [#allocation3]
    $region5: #{tpu_custom_call.1} parent=1 // pred_fallthru
      _
    // Predicated region
    $region6: #{tpu_custom_call.1} parent=1 // pred_check
      _
    $region7: #{tpu_custom_call.1} parent=1 // pred_check_branch
      %21 = sbr.rel (0) target = $region9
    $region8: #{tpu_custom_call.1} parent=1 // pred_region
      %s23 = ssub.s32 128, 128
      %24 = vsyncadd [#allocation6], %s23
      %s26 = sshll.u32 [#allocation5], 4
      %s27 = int_to_ptr.vmem [resolvable:$true] %s26
      %29 = dma.hbm_to_vmem [thread:$0]  %s1, 128, %s27, [#allocation6]
    $region9: #{tpu_custom_call.1} parent=1 // pred_fallthru
      _
    // Predicated region
    $region10: #{tpu_custom_call.1} parent=1 // pred_check
      _
    $region11: #{tpu_custom_call.1} parent=1 // pred_check_branch
      %31 = sbr.rel (0) target = $region13
    $region12: #{tpu_custom_call.1} parent=1 // pred_region
      %32 = dma.done [#allocation3], 128
    $region13: #{tpu_custom_call.1} parent=1 // pred_fallthru
      _
    // Predicated region
    $region14: #{tpu_custom_call.1} parent=1 // pred_check
      _
    $region15: #{tpu_custom_call.1} parent=1 // pred_check_branch
      %34 = sbr.rel (0) target = $region17
    $region16: #{tpu_custom_call.1} parent=1 // pred_region
      %35 = dma.done [#allocation6], 128
    $region17: #{tpu_custom_call.1} parent=1 // pred_fallthru
      _
    %v36 = vld [vmem:[#allocation2] sm:$0xff]
    %v37 = vunpack.c.0.s8 %v36
    %v38 = vunpack.c.1.s8 %v36
    %v39 = vunpack.c.2.s8 %v36
    %v40 = vunpack.c.3.s8 %v36
    %v41 = vcvt.s32.f32 %v37
    %v42 = vcvt.s32.f32 %v38
    %v43 = vcvt.s32.f32 %v39
    %v44 = vcvt.s32.f32 %v40
    %v45 = vld [vmem:[#allocation5] sm:$0xff]
    %v46 = vunpack.c.0.s8 %v45
    %v47 = vunpack.c.1.s8 %v45
    %v48 = vunpack.c.2.s8 %v45
    %v49 = vunpack.c.3.s8 %v45
    %v50 = vcvt.s32.f32 %v46
    %v51 = vcvt.s32.f32 %v47
    %v52 = vcvt.s32.f32 %v48
    %v53 = vcvt.s32.f32 %v49
    %v54 = vrcp.pop %v50
    %v55 = vmul.f32 %v41, %v54
    %v56 = vrcp.pop %v51
    %v57 = vmul.f32 %v42, %v56
    %v58 = vrcp.pop %v52
    %v59 = vmul.f32 %v43, %v58
    %v60 = vrcp.pop %v53
    %v61 = vmul.f32 %v44, %v60
    %v62 = vfloor.f32 %v55
    %v63 = vfloor.f32 %v57
    %v64 = vfloor.f32 %v59
    %v65 = vfloor.f32 %v61
    %v66 = vmul.f32 %v62, %v50
    %v67 = vmul.f32 %v63, %v51
    %v68 = vmul.f32 %v64, %v52
    %v69 = vmul.f32 %v65, %v53
    %v70 = vsub.f32 %v41, %v66
    %v71 = vsub.f32 %v42, %v67
    %v72 = vsub.f32 %v43, %v68
    %v73 = vsub.f32 %v44, %v69
    %vm74 = vcmp.eq.f32.partialorder %v70, %v50
    %vm75 = vcmp.eq.f32.partialorder %v71, %v51
    %vm76 = vcmp.eq.f32.partialorder %v72, %v52
    %vm77 = vcmp.eq.f32.partialorder %v73, %v53
    %v78 = vadd.f32 %v62, 1.0
    %v79 = vadd.f32 %v63, 1.0
    %v80 = vadd.f32 %v64, 1.0
    %v81 = vadd.f32 %v65, 1.0
    %v82 = vsel %vm74, %v78, %v62
    %v83 = vsel %vm75, %v79, %v63
    %v84 = vsel %vm76, %v80, %v64
    %v85 = vsel %vm77, %v81, %v65
    %v86 = vcvt.f32.s32.to.zero.pseudo %v82
    %v87 = vcvt.f32.s32.to.zero.pseudo %v83
    %v88 = vcvt.f32.s32.to.zero.pseudo %v84
    %v89 = vcvt.f32.s32.to.zero.pseudo %v85
    %v90 = vcombine.high %v86, %v86
    %v91 = vcombine.high %v87, %v87
    %v92 = vcombine.high %v88, %v88
    %v93 = vcombine.high %v89, %v89
    %v94 = vpack.c.b16 %v86, %v86
    %v95 = vpack.c.b8 %v94, %v94
    %v96 = vpack.c.b16 %v90, %v90
    %v97 = vpack.c.b8 %v96, %v96
    %v98 = vpack.c.b16 %v87, %v87
    %v99 = vpack.c.b8 %v98, %v98
    %v100 = vpack.c.b16 %v91, %v91
    %v101 = vpack.c.b8 %v100, %v100
    %v102 = vpack.c.b16 %v88, %v88
    %v103 = vpack.c.b8 %v102, %v102
    %v104 = vpack.c.b16 %v92, %v92
    %v105 = vpack.c.b8 %v104, %v104
    %v106 = vpack.c.b16 %v89, %v89
    %v107 = vpack.c.b8 %v106, %v106
    %v108 = vpack.c.b16 %v93, %v93
    %v109 = vpack.c.b8 %v108, %v108
    %v110 = vcombine.low %v95, %v97
    %v111 = vcombine.low %v99, %v101
    %v112 = vcombine.low %v103, %v105
    %v113 = vcombine.low %v107, %v109
    %v115 = vunpack.c.l.s4 1966171168
    %v116 = vunpack.c.0.s8 %v115
    %v117 = vlaneseq
    %v118 = vshrl.u32 %v117, 7
    %v119 = vsub.s32 %v116, %v118
    %v120 = vrot.slane %v110, %v119
    %v122 = vunpack.c.l.s4 1966171168
    %v123 = vunpack.c.0.s8 %v122
    %v124 = vlaneseq
    %v125 = vshrl.u32 %v124, 7
    %v126 = vsub.s32 %v123, %v125
    %v127 = vrot.slane %v111, %v126
    %v129 = vunpack.c.l.s4 1966171168
    %v130 = vunpack.c.0.s8 %v129
    %v131 = vlaneseq
    %v132 = vshrl.u32 %v131, 7
    %v133 = vsub.s32 %v130, %v132
    %v134 = vrot.slane %v112, %v133
    %v136 = vunpack.c.l.s4 1966171168
    %v137 = vunpack.c.0.s8 %v136
    %v138 = vlaneseq
    %v139 = vshrl.u32 %v138, 7
    %v140 = vsub.s32 %v137, %v139
    %v141 = vrot.slane %v113, %v140
    %v142 = vcombine.low %v120, %v127
    %v143 = vcombine.low %v134, %v141
    %v145 = vunpack.c.l.s4 1966171168
    %v146 = vunpack.c.0.s8 %v145
    %v147 = vlaneseq
    %v148 = vshrl.u32 %v147, 7
    %v149 = vsub.s32 %v146, %v148
    %v150 = vrot.slane %v142, %v149
    %v152 = vunpack.c.l.s4 1966171168
    %v153 = vunpack.c.0.s8 %v152
    %v154 = vlaneseq
    %v155 = vshrl.u32 %v154, 7
    %v156 = vsub.s32 %v153, %v155
    %v157 = vrot.slane %v143, %v156
    %v158 = vcombine.low %v150, %v157
    %vm159 = vcmask 1040384
    %vm160 = vsmask.f32 256
    %vm161 = vmand %vm159, %vm160
    %vm162 = vcmask 1041409
    %vm163 = vsmask.f32 1280
    %vm164 = vmand %vm162, %vm163
    %vm165 = vmor %vm164, %vm161
    %vm166 = vcmask 1042434
    %vm167 = vsmask.f32 2304
    %vm168 = vmand %vm166, %vm167
    %vm169 = vmor %vm168, %vm165
    %vm170 = vcmask 1043459
    %vm171 = vsmask.f32 3328
    %vm172 = vmand %vm170, %vm171
    %vm173 = vmor %vm172, %vm169
    %vm174 = vcmask 1044484
    %vm175 = vsmask.f32 4352
    %vm176 = vmand %vm174, %vm175
    %vm177 = vmor %vm176, %vm173
    %vm178 = vcmask 1045509
    %vm179 = vsmask.f32 5376
    %vm180 = vmand %vm178, %vm179
    %vm181 = vmor %vm180, %vm177
    %vm182 = vcmask 1046534
    %vm183 = vsmask.f32 6400
    %vm184 = vmand %vm182, %vm183
    %vm185 = vmor %vm184, %vm181
    %vm186 = vcmask 1047559
    %vm187 = vsmask.f32 7424
    %vm188 = vmand %vm186, %vm187
    %vm189 = vmor %vm188, %vm185
    %v190 = vld [vmem:[#allocation7] sm:$0xff]
    %v191 = vsel %vm189, %v158, %v190
    %192 = vst [vmem:[#allocation7] sm:$0xff] %v191
    // Predicated region
    $region18: #{tpu_custom_call.1} parent=1 // pred_check
      _
    $region19: #{tpu_custom_call.1} parent=1 // pred_check_branch
      %194 = sbr.rel (0) target = $region21
    $region20: #{tpu_custom_call.1} parent=1 // pred_region
      %s196 = ssub.s32 128, 128
      %197 = vsyncadd [#allocation4], %s196
      %s199 = sshll.u32 [#allocation7], 4
      %s200 = int_to_ptr.vmem [resolvable:$true] %s199
      %202 = dma.vmem_to_hbm [thread:$0]  %s200, 128, %s2, [#allocation4]
    $region21: #{tpu_custom_call.1} parent=1 // pred_fallthru
      _
    // Predicated region
    $region22: #{tpu_custom_call.1} parent=1 // pred_check
      _
    $region23: #{tpu_custom_call.1} parent=1 // pred_check_branch
      %204 = sbr.rel (0) target = $region25
    $region24: #{tpu_custom_call.1} parent=1 // pred_region
      %205 = dma.done [#allocation4], 128
    $region25: #{tpu_custom_call.1} parent=1 // pred_fallthru
      _
    %206 = vsyncpa [#allocation3], 1
    %207 = vsyncpa [#allocation6], 1
    %208 = vsyncpa [#allocation4], 1

</llo_original>
